<compile_context>
chip_gen: v7x
topology: tpu7x:2x2x1
jax: 0.10.0
libtpu: 0.0.40
codegen_flags: <defaults>
</compile_context>

<pallas_src>
import numpy as np
import jax
import jax.numpy as jnp
from jax.experimental import pallas as pl
from jax.experimental.pallas import tpu as pltpu

n_qubits = 8
n_layers = 4
DIM = 2 ** n_qubits            # 256
N_CLASSES = 10
PAD_CLASSES = 128              # lane-dense width used *inside* the kernel
NEG_BIG = -1.0e30              # bias on padded (fake) classes -> vanish in log_softmax

# v5e is MXU-slot bound on the f32 matmul; set True there for ~1.5-2x on the
# matmul (bf16 inputs, f32 accumulation, ~1e-3 relative error). v6e/v7x are
# HBM-bound, so keep False to preserve reference numerics.
USE_BF16_MATMUL = False


# ----------------------------------------------------------------------------
# Parameter setup (plain numpy): fold the quantum circuit into a 256x256
# observable matrix  A = Re(U^H Z_4 U).
# ----------------------------------------------------------------------------
def _kron_single(gate_2x2, wire):
    # PennyLane convention: wire 0 is the most-significant bit of the state index.
    mats = [np.eye(2, dtype=np.complex128) for _ in range(n_qubits)]
    mats[wire] = gate_2x2
    out = mats[0]
    for m in mats[1:]:
        out = np.kron(out, m)
    return out


def _cnot_full(control, target):
    U = np.zeros((DIM, DIM), dtype=np.complex128)
    for idx in range(DIM):
        bits = [(idx >> (n_qubits - 1 - w)) & 1 for w in range(n_qubits)]
        if bits[control] == 1:
            bits[target] ^= 1
        new_idx = 0
        for w in range(n_qubits):
            new_idx |= bits[w] << (n_qubits - 1 - w)
        U[new_idx, idx] = 1.0
    return U


def _rx(theta):
    c, s = np.cos(theta / 2.0), np.sin(theta / 2.0)
    return np.array([[c, -1j * s], [-1j * s, c]], dtype=np.complex128)


def _rz(theta):
    return np.array([[np.exp(-1j * theta / 2.0), 0.0],
                     [0.0, np.exp(1j * theta / 2.0)]], dtype=np.complex128)


def build_observable_matrix(circuit_weights):
    """circuit_weights: (n_layers, 3, n_qubits) float. Returns (256,256) float32."""
    U = np.eye(DIM, dtype=np.complex128)

    def apply(gate, U):
        return gate @ U

    # feature_encoding entanglers (after amplitude embedding)
    for i in range(0, n_qubits - 1, 2):
        U = apply(_cnot_full(i, i + 1), U)
    for i in range(1, n_qubits - 1, 2):
        U = apply(_cnot_full(i, i + 1), U)

    # variational blocks
    for layer in range(n_layers):
        p = circuit_weights[layer]          # (3, n_qubits)
        for i in range(n_qubits):
            U = apply(_kron_single(_rx(p[0, i]), i), U)
            U = apply(_kron_single(_rz(p[1, i]), i), U)
            U = apply(_kron_single(_rx(p[2, i]), i), U)
        for i in range(0, n_qubits - 1, 2):
            U = apply(_cnot_full(i, i + 1), U)
        for i in range(1, n_qubits - 1, 2):
            U = apply(_cnot_full(i, i + 1), U)

    Z4 = _kron_single(np.diag([1.0, -1.0]).astype(np.complex128), n_qubits // 2)
    M = U.conj().T @ Z4 @ U                 # Hermitian
    # For a real statevector psi, <psi|M|psi> = psi^T Re(M) psi (Im(M) antisymmetric).
    return np.real(M).astype(np.float32)


# ----------------------------------------------------------------------------
# Pallas kernel (per batch tile):
#   mean-subtract  ->  q = (xc^T A xc) / (||xc||^2 + eps)
#   -> Linear(1,10) on 128 padded lanes -> log_softmax -> narrow (tb,10) store.
# The (x-mean)/(std+1e-8) of the reference followed by
# AmplitudeEmbedding(normalize=True) reduces to psi = xc/||xc|| (positive
# per-row scales cancel), and psi^T A psi == (xc^T A xc)/||xc||^2, so psi is
# never materialized.
# ----------------------------------------------------------------------------
def qcl_kernel(x_ref, a_ref, w_ref, b_ref, o_ref):
    x = x_ref[...]                                     # (TB, 256) f32

    mean = jnp.mean(x, axis=1, keepdims=True)
    xc = x - mean                                      # (TB, 256)
    inv_sq_norm = 1.0 / (jnp.sum(xc * xc, axis=1, keepdims=True) + 1e-12)

    # <xc| A |xc>  (MXU matmul + lane reduction); optional bf16 inputs for v5e.
    lhs = xc.astype(a_ref.dtype) if a_ref.dtype != xc.dtype else xc
    r = jnp.dot(lhs, a_ref[...], preferred_element_type=jnp.float32)   # (TB, 256)
    q = jnp.sum(r * xc, axis=1, keepdims=True) * inv_sq_norm           # (TB, 1)

    # Linear(1, 10) on lane-padded width 128: padded lanes have w=0, b=-1e30.
    logits = q * w_ref[...] + b_ref[...]               # (TB, 128)

    # log_softmax over classes (padded lanes contribute exp(~-inf) = 0)
    m = jnp.max(logits, axis=1, keepdims=True)
    lse = jnp.log(jnp.sum(jnp.exp(logits - m), axis=1, keepdims=True)) + m
    logp = logits - lse

    # Narrow store: only the 10 real classes hit HBM.
    o_ref[...] = logp[:, :N_CLASSES]


def _round_up(n, m):
    return ((n + m - 1) // m) * m


_MAX_TB = 2048   # tile cap: intermediates (~4 x tb*256*4B) + resident A stay << v7x VMEM


def _choose_batch_tile(B):
    """Batch tile: large enough to amortize the ~0.35us/step pipeline overhead,
    capped at 2048 rows (v7x VMEM budget), and >=2 grid steps for B > 256 so
    the 'parallel' batch axis can shard across v7x's two TensorCores."""
    Bp8 = _round_up(B, 8)
    if Bp8 <= 256:
        return Bp8                       # tiny batch: one tile, megacore irrelevant
    steps = 4 if Bp8 >= 1024 else 2      # >=2 steps per core at large B
    tb = _round_up(pl.cdiv(Bp8, steps), 8)
    if tb > 1024:
        tb = _round_up(tb, 256)          # keep large tiles a multiple of 256
    return min(_MAX_TB, tb)


@jax.jit
def quantum_classifier_forward(x, A, w_pad, b_pad):
    B = x.shape[0]
    tb = _choose_batch_tile(B)
    Bp = _round_up(B, tb)
    if Bp != B:
        # Zero rows -> xc = 0 -> q = 0 (eps guard); padded rows sliced off below.
        x = jnp.pad(x, ((0, Bp - B), (0, 0)))

    cost = pl.CostEstimate(
        flops=2 * Bp * DIM * DIM + 8 * Bp * DIM,
        transcendentals=Bp * (PAD_CLASSES + 2),
        bytes_accessed=(Bp * DIM * 4 + Bp * N_CLASSES * 4
                        + DIM * DIM * A.dtype.itemsize + 2 * PAD_CLASSES * 4),
    )

    out = pl.pallas_call(
        qcl_kernel,
        out_shape=jax.ShapeDtypeStruct((Bp, N_CLASSES), jnp.float32),
        grid=(Bp // tb,),
        in_specs=[
            pl.BlockSpec((tb, DIM), lambda i: (i, 0)),           # x: streamed over batch
            pl.BlockSpec((DIM, DIM), lambda i: (0, 0)),          # A: VMEM-resident
            pl.BlockSpec((1, PAD_CLASSES), lambda i: (0, 0)),    # W row: resident
            pl.BlockSpec((1, PAD_CLASSES), lambda i: (0, 0)),    # b row: resident
        ],
        out_specs=pl.BlockSpec((tb, N_CLASSES), lambda i: (i, 0)),  # 10 == full dim
        compiler_params=pltpu.CompilerParams(
            dimension_semantics=("parallel",),
            vmem_limit_bytes=32 * 1024 * 1024,
        ),
        cost_estimate=cost,
    )(x, A, w_pad, b_pad)

    return out if Bp == B else out[:B]


if __name__ == "__main__":
    # Deterministic parameters.
    rng = np.random.default_rng(0)
    circuit_weights = rng.standard_normal((n_layers, 3, n_qubits))
    A = jnp.asarray(build_observable_matrix(circuit_weights))          # (256, 256) f32
    if USE_BF16_MATMUL:
        A = A.astype(jnp.bfloat16)

    # nn.Linear(1, 10): weight (10, 1), bias (10,), lane-padded to 128.
    lin_w = rng.uniform(-1.0, 1.0, size=(N_CLASSES, 1)).astype(np.float32)
    lin_b = rng.uniform(-1.0, 1.0, size=(N_CLASSES,)).astype(np.float32)
    w_np = np.zeros((1, PAD_CLASSES), dtype=np.float32)
    b_np = np.full((1, PAD_CLASSES), NEG_BIG, dtype=np.float32)
    w_np[0, :N_CLASSES] = lin_w[:, 0]
    b_np[0, :N_CLASSES] = lin_b
    w_pad = jnp.asarray(w_np)
    b_pad = jnp.asarray(b_np)

    # Deterministic example input: batch of 8, 256 amplitudes each.
    key = jax.random.PRNGKey(0)
    x = jax.random.normal(key, (8, DIM), dtype=jnp.float32)

    out = quantum_classifier_forward(x, A, w_pad, b_pad)
    jax.block_until_ready(out)

    assert out.shape == (8, N_CLASSES)
    assert bool(jnp.all(jnp.isfinite(out)))
    # log_softmax rows must sum to ~1 in probability space.
    assert bool(jnp.all(jnp.abs(jnp.sum(jnp.exp(out), axis=1) - 1.0) < 1e-4))
    print("KERNEL_OK")
</pallas_src>

<mosaic_0001>
module attributes {stable_mosaic.version = 11 : i64} {
  func.func @qcl_kernel(%arg0: i32, %arg1: memref<8x256xf32, #tpu.memory_space<vmem>>, %arg2: memref<256x256xf32, #tpu.memory_space<vmem>>, %arg3: memref<1x128xf32, #tpu.memory_space<vmem>>, %arg4: memref<1x128xf32, #tpu.memory_space<vmem>>, %arg5: memref<8x10xf32, #tpu.memory_space<vmem>>) attributes {dimension_semantics = [#tpu.dimension_semantics<parallel>], iteration_bounds = array<i64: 1>, scalar_prefetch = 0 : i64, scratch_operands = 0 : i64, tpu.core_type = #tpu.core_type<tc>, window_params = [{transform_indices = @transform_0, window_bounds = array<i64: 8, 256>}, {pipeline_mode = #tpu.pipeline_mode<synchronous>, transform_indices = @transform_1, window_bounds = array<i64: 256, 256>}, {pipeline_mode = #tpu.pipeline_mode<synchronous>, transform_indices = @transform_2, window_bounds = array<i64: 1, 128>}, {pipeline_mode = #tpu.pipeline_mode<synchronous>, transform_indices = @transform_3, window_bounds = array<i64: 1, 128>}, {transform_indices = @transform_4, window_bounds = array<i64: 8, 10>}]} {
    %c0 = arith.constant 0 : index
    %c0_0 = arith.constant 0 : index
    %0 = vector.load %arg1[%c0, %c0_0] : memref<8x256xf32, #tpu.memory_space<vmem>>, vector<8x256xf32>
    %cst = arith.constant dense<0.000000e+00> : vector<8xf32>
    %1 = vector.multi_reduction <add>, %0, %cst [1] : vector<8x256xf32> to vector<8xf32>
    %2 = vector.shape_cast %1 : vector<8xf32> to vector<8x1xf32>
    %cst_1 = arith.constant 2.560000e+02 : f32
    %3 = vector.broadcast %cst_1 : f32 to vector<8x1xf32>
    %4 = arith.divf %2, %3 : vector<8x1xf32>
    %5 = vector.broadcast %4 : vector<8x1xf32> to vector<8x256xf32>
    %6 = arith.subf %0, %5 : vector<8x256xf32>
    %7 = arith.mulf %6, %6 : vector<8x256xf32>
    %cst_2 = arith.constant dense<0.000000e+00> : vector<8xf32>
    %8 = vector.multi_reduction <add>, %7, %cst_2 [1] : vector<8x256xf32> to vector<8xf32>
    %9 = vector.shape_cast %8 : vector<8xf32> to vector<8x1xf32>
    %cst_3 = arith.constant 9.99999996E-13 : f32
    %10 = vector.broadcast %cst_3 : f32 to vector<8x1xf32>
    %11 = arith.addf %9, %10 : vector<8x1xf32>
    %cst_4 = arith.constant 1.000000e+00 : f32
    %12 = vector.broadcast %cst_4 : f32 to vector<8x1xf32>
    %13 = arith.divf %12, %11 : vector<8x1xf32>
    %c0_5 = arith.constant 0 : index
    %c0_6 = arith.constant 0 : index
    %14 = vector.load %arg2[%c0_5, %c0_6] : memref<256x256xf32, #tpu.memory_space<vmem>>, vector<256x256xf32>
    %cst_7 = arith.constant dense<0.000000e+00> : vector<8x256xf32>
    %15 = tpu.matmul %6, %14, %cst_7 {dimension_numbers = #tpu.dot_dimension_numbers<[1], [0], [0], [1], [0, 0, 1, 1], [], []>} : vector<8x256xf32>, vector<256x256xf32>, vector<8x256xf32> -> vector<8x256xf32>
    %16 = arith.mulf %15, %6 : vector<8x256xf32>
    %cst_8 = arith.constant dense<0.000000e+00> : vector<8xf32>
    %17 = vector.multi_reduction <add>, %16, %cst_8 [1] : vector<8x256xf32> to vector<8xf32>
    %18 = vector.shape_cast %17 : vector<8xf32> to vector<8x1xf32>
    %19 = arith.mulf %18, %13 : vector<8x1xf32>
    %c0_9 = arith.constant 0 : index
    %c0_10 = arith.constant 0 : index
    %20 = vector.load %arg3[%c0_9, %c0_10] : memref<1x128xf32, #tpu.memory_space<vmem>>, vector<1x128xf32>
    %21 = vector.broadcast %19 : vector<8x1xf32> to vector<8x128xf32>
    %22 = vector.broadcast %20 : vector<1x128xf32> to vector<8x128xf32>
    %23 = arith.mulf %21, %22 : vector<8x128xf32>
    %c0_11 = arith.constant 0 : index
    %c0_12 = arith.constant 0 : index
    %24 = vector.load %arg4[%c0_11, %c0_12] : memref<1x128xf32, #tpu.memory_space<vmem>>, vector<1x128xf32>
    %25 = vector.broadcast %24 : vector<1x128xf32> to vector<8x128xf32>
    %26 = arith.addf %23, %25 : vector<8x128xf32>
    %cst_13 = arith.constant dense<0xFF800000> : vector<8xf32>
    %27 = vector.multi_reduction <maximumf>, %26, %cst_13 [1] : vector<8x128xf32> to vector<8xf32>
    %28 = vector.shape_cast %27 : vector<8xf32> to vector<8x1xf32>
    %29 = vector.broadcast %28 : vector<8x1xf32> to vector<8x128xf32>
    %30 = arith.subf %26, %29 : vector<8x128xf32>
    %31 = math.exp %30 : vector<8x128xf32>
    %cst_14 = arith.constant dense<0.000000e+00> : vector<8xf32>
    %32 = vector.multi_reduction <add>, %31, %cst_14 [1] : vector<8x128xf32> to vector<8xf32>
    %33 = vector.shape_cast %32 : vector<8xf32> to vector<8x1xf32>
    %34 = math.log %33 : vector<8x1xf32>
    %35 = arith.addf %34, %28 : vector<8x1xf32>
    %36 = vector.broadcast %35 : vector<8x1xf32> to vector<8x128xf32>
    %37 = arith.subf %26, %36 : vector<8x128xf32>
    %38 = vector.extract_strided_slice %37 {offsets = [0, 0], sizes = [8, 10], strides = [1, 1]} : vector<8x128xf32> to vector<8x10xf32>
    %c0_15 = arith.constant 0 : index
    %c0_16 = arith.constant 0 : index
    %39 = vector.load %arg5[%c0_15, %c0_16] : memref<8x10xf32, #tpu.memory_space<vmem>>, vector<8x10xf32>
    tpu.vector_store %arg5[%c0_15, %c0_16], %38 {strides = array<i32>} : memref<8x10xf32, #tpu.memory_space<vmem>>, vector<8x10xf32>,
    return
  }
  func.func @transform_0(%arg0: i32) -> (i32, i32) {
    %c0_i32 = arith.constant 0 : i32
    %c0_i32_0 = arith.constant 0 : i32
    return %arg0, %c0_i32 : i32, i32
  }
  func.func @transform_1(%arg0: i32) -> (i32, i32) {
    %c0_i32 = arith.constant 0 : i32
    %c0_i32_0 = arith.constant 0 : i32
    %c0_i32_1 = arith.constant 0 : i32
    return %c0_i32, %c0_i32_0 : i32, i32
  }
  func.func @transform_2(%arg0: i32) -> (i32, i32) {
    %c0_i32 = arith.constant 0 : i32
    %c0_i32_0 = arith.constant 0 : i32
    %c0_i32_1 = arith.constant 0 : i32
    return %c0_i32, %c0_i32_0 : i32, i32
  }
  func.func @transform_3(%arg0: i32) -> (i32, i32) {
    %c0_i32 = arith.constant 0 : i32
    %c0_i32_0 = arith.constant 0 : i32
    %c0_i32_1 = arith.constant 0 : i32
    return %c0_i32, %c0_i32_0 : i32, i32
  }
  func.func @transform_4(%arg0: i32) -> (i32, i32) {
    %c0_i32 = arith.constant 0 : i32
    %c0_i32_0 = arith.constant 0 : i32
    return %arg0, %c0_i32 : i32, i32
  }
}

</mosaic_0001>

<llo_original>
// kernel: quantum_classifier_forward.1
$region0: #{quantum_classifier_forward.1}
  #allocation0 [shape = 'u32[]', space=smem, size = 0x4, offset = 0x4, fixed_abs, tag = 'smem constant byte address 0x4 - core index']
  #allocation1 [shape = 'u32[144,128]{1,0:T(1,128)}', space=vmem, size = 0x12000, scoped, tag = 'internal scratch']
  %s0 = inlined_call_operand.hbm [shape: f32[8,256], index: 0, kind: input, shape index: {}]
  %s1 = inlined_call_operand.hbm [shape: f32[256,256], index: 1, kind: input, shape index: {}]
  %s2 = inlined_call_operand.vmem [shape: f32[1,128], index: 2, kind: input, shape index: {}]
  %s3 = inlined_call_operand.vmem [shape: f32[1,128], index: 3, kind: input, shape index: {}]
  %s4 = inlined_call_operand.hbm [shape: f32[8,10], index: 4, kind: output, shape index: {}]
  %s5 = sld [smem:[#allocation0]]
  $region34: #{quantum_classifier_forward.1} parent=0
    _
  %s7 = ssub.s32 1, %s5
  %s8 = scalar_select 0, %s7, %s5
  $region1: #{quantum_classifier_forward.1} parent=0
    #allocation2 [shape = 'u8[8192]{0}', space=vmem, size = 0x2000, scoped, tag = 'input window, operand 0, single buffered']
    #allocation3 [shape = 's32[1]{0}', space=sflag, size = 0x4, scoped, tag = 'scoped memory for quantum_classifier_forward.1']
    #allocation4 [shape = 's32[1]{0}', space=sflag, size = 0x4, scoped, tag = 'scoped memory for quantum_classifier_forward.1']
    #allocation5 [shape = 'u8[262144]{0}', space=vmem, size = 0x40000, scoped, tag = 'input window, operand 1, single buffered']
    #allocation6 [shape = 's32[1]{0}', space=sflag, size = 0x4, scoped, tag = 'scoped memory for quantum_classifier_forward.1']
    #allocation7 [shape = 'u8[4096]{0}', space=vmem, size = 0x1000, scoped, tag = 'output window, operand 0, single buffered']
    %9 = vsyncpa [#allocation3], 0
    %10 = vsyncpa [#allocation6], 0
    %11 = vsyncpa [#allocation4], 0
    // Predicated region
    $region2: #{quantum_classifier_forward.1} parent=1 // pred_check
      _
    $region3: #{quantum_classifier_forward.1} parent=1 // pred_check_branch
      %13 = sbr.rel (0) target = $region5
    $region4: #{quantum_classifier_forward.1} parent=1 // pred_region
      %s15 = ssub.s32 256, 256
      %16 = vsyncadd [#allocation3], %s15
      %s18 = sshll.u32 [#allocation2], 4
      %s19 = int_to_ptr.vmem [resolvable:$true] %s18
      %21 = dma.hbm_to_vmem [thread:$0]  %s0, 256, %s19, [#allocation3]
    $region5: #{quantum_classifier_forward.1} parent=1 // pred_fallthru
      _
    // Predicated region
    $region6: #{quantum_classifier_forward.1} parent=1 // pred_check
      _
    $region7: #{quantum_classifier_forward.1} parent=1 // pred_check_branch
      %23 = sbr.rel (0) target = $region9
    $region8: #{quantum_classifier_forward.1} parent=1 // pred_region
      %s25 = ssub.s32 8192, 8192
      %26 = vsyncadd [#allocation6], %s25
      %s27 = sshll.u32 [#allocation5], 4
      %s28 = int_to_ptr.vmem [resolvable:$true] %s27
      %33 = dma.hbm_to_vmem [thread:$0]  %s1, 8192, %s28, [#allocation6], 256, 256, 16
    $region9: #{quantum_classifier_forward.1} parent=1 // pred_fallthru
      _
    // Predicated region
    $region10: #{quantum_classifier_forward.1} parent=1 // pred_check
      _
    $region11: #{quantum_classifier_forward.1} parent=1 // pred_check_branch
      %35 = sbr.rel (0) target = $region13
    $region12: #{quantum_classifier_forward.1} parent=1 // pred_region
      _
    $region13: #{quantum_classifier_forward.1} parent=1 // pred_fallthru
      _
    // Predicated region
    $region14: #{quantum_classifier_forward.1} parent=1 // pred_check
      _
    $region15: #{quantum_classifier_forward.1} parent=1 // pred_check_branch
      %37 = sbr.rel (0) target = $region17
    $region16: #{quantum_classifier_forward.1} parent=1 // pred_region
      _
    $region17: #{quantum_classifier_forward.1} parent=1 // pred_fallthru
      _
    // Predicated region
    $region18: #{quantum_classifier_forward.1} parent=1 // pred_check
      _
    $region19: #{quantum_classifier_forward.1} parent=1 // pred_check_branch
      %39 = sbr.rel (0) target = $region21
    $region20: #{quantum_classifier_forward.1} parent=1 // pred_region
      %40 = dma.done [#allocation3], 256
    $region21: #{quantum_classifier_forward.1} parent=1 // pred_fallthru
      _
    // Predicated region
    $region22: #{quantum_classifier_forward.1} parent=1 // pred_check
      _
    $region23: #{quantum_classifier_forward.1} parent=1 // pred_check_branch
      %42 = sbr.rel (0) target = $region25
    $region24: #{quantum_classifier_forward.1} parent=1 // pred_region
      %43 = dma.done [#allocation6], 8192
    $region25: #{quantum_classifier_forward.1} parent=1 // pred_fallthru
      _
    %v44 = vld [vmem:[#allocation2] sm:$0xff]
    %v45 = vld [vmem:[#allocation2 + $0x8] sm:$0xff]
    %v46 = vadd.f32 %v44, %v45
    %47 = vadd.xlane.f32.xlu0 %v46
    %v48 = vpop.xlane.xlu0 %47
    %v49 = vrcp.pop 256.0
    %v50 = vmul.f32 %v48, %v49
    %v51 = vsub.f32 %v44, %v50
    %v52 = vsub.f32 %v45, %v50
    %v53 = vmul.f32 %v51, %v51
    %v54 = vmul.f32 %v52, %v52
    %v55 = vadd.f32 %v53, %v54
    %56 = vadd.xlane.f32.xlu0 %v55
    %v57 = vpop.xlane.xlu0 %56
    %v58 = vadd.f32 %v57, 1e-12
    %v59 = vrcp.pop %v58
    %v60 = vmul.f32 1.0, %v59
    %v61 = vld [vmem:[#allocation5] sm:$0xff]
    %v62 = vld [vmem:[#allocation5 + $0x8] sm:$0xff]
    %v63 = vld [vmem:[#allocation5 + $0x10] sm:$0xff]
    %v64 = vld [vmem:[#allocation5 + $0x18] sm:$0xff]
    %v65 = vld [vmem:[#allocation5 + $0x20] sm:$0xff]
    %v66 = vld [vmem:[#allocation5 + $0x28] sm:$0xff]
    %v67 = vld [vmem:[#allocation5 + $0x30] sm:$0xff]
    %v68 = vld [vmem:[#allocation5 + $0x38] sm:$0xff]
    %v69 = vld [vmem:[#allocation5 + $0x40] sm:$0xff]
    %v70 = vld [vmem:[#allocation5 + $0x48] sm:$0xff]
    %v71 = vld [vmem:[#allocation5 + $0x50] sm:$0xff]
    %v72 = vld [vmem:[#allocation5 + $0x58] sm:$0xff]
    %v73 = vld [vmem:[#allocation5 + $0x60] sm:$0xff]
    %v74 = vld [vmem:[#allocation5 + $0x68] sm:$0xff]
    %v75 = vld [vmem:[#allocation5 + $0x70] sm:$0xff]
    %v76 = vld [vmem:[#allocation5 + $0x78] sm:$0xff]
    %v77 = vld [vmem:[#allocation5 + $0x80] sm:$0xff]
    %v78 = vld [vmem:[#allocation5 + $0x88] sm:$0xff]
    %v79 = vld [vmem:[#allocation5 + $0x90] sm:$0xff]
    %v80 = vld [vmem:[#allocation5 + $0x98] sm:$0xff]
    %v81 = vld [vmem:[#allocation5 + $0xa0] sm:$0xff]
    %v82 = vld [vmem:[#allocation5 + $0xa8] sm:$0xff]
    %v83 = vld [vmem:[#allocation5 + $0xb0] sm:$0xff]
    %v84 = vld [vmem:[#allocation5 + $0xb8] sm:$0xff]
    %v85 = vld [vmem:[#allocation5 + $0xc0] sm:$0xff]
    %v86 = vld [vmem:[#allocation5 + $0xc8] sm:$0xff]
    %v87 = vld [vmem:[#allocation5 + $0xd0] sm:$0xff]
    %v88 = vld [vmem:[#allocation5 + $0xd8] sm:$0xff]
    %v89 = vld [vmem:[#allocation5 + $0xe0] sm:$0xff]
    %v90 = vld [vmem:[#allocation5 + $0xe8] sm:$0xff]
    %v91 = vld [vmem:[#allocation5 + $0xf0] sm:$0xff]
    %v92 = vld [vmem:[#allocation5 + $0xf8] sm:$0xff]
    %v93 = vld [vmem:[#allocation5 + $0x100] sm:$0xff]
    %v94 = vld [vmem:[#allocation5 + $0x108] sm:$0xff]
    %v95 = vld [vmem:[#allocation5 + $0x110] sm:$0xff]
    %v96 = vld [vmem:[#allocation5 + $0x118] sm:$0xff]
    %v97 = vld [vmem:[#allocation5 + $0x120] sm:$0xff]
    %v98 = vld [vmem:[#allocation5 + $0x128] sm:$0xff]
    %v99 = vld [vmem:[#allocation5 + $0x130] sm:$0xff]
    %v100 = vld [vmem:[#allocation5 + $0x138] sm:$0xff]
    %v101 = vld [vmem:[#allocation5 + $0x140] sm:$0xff]
    %v102 = vld [vmem:[#allocation5 + $0x148] sm:$0xff]
    %v103 = vld [vmem:[#allocation5 + $0x150] sm:$0xff]
    %v104 = vld [vmem:[#allocation5 + $0x158] sm:$0xff]
    %v105 = vld [vmem:[#allocation5 + $0x160] sm:$0xff]
    %v106 = vld [vmem:[#allocation5 + $0x168] sm:$0xff]
    %v107 = vld [vmem:[#allocation5 + $0x170] sm:$0xff]
    %v108 = vld [vmem:[#allocation5 + $0x178] sm:$0xff]
    %v109 = vld [vmem:[#allocation5 + $0x180] sm:$0xff]
    %v110 = vld [vmem:[#allocation5 + $0x188] sm:$0xff]
    %v111 = vld [vmem:[#allocation5 + $0x190] sm:$0xff]
    %v112 = vld [vmem:[#allocation5 + $0x198] sm:$0xff]
    %v113 = vld [vmem:[#allocation5 + $0x1a0] sm:$0xff]
    %v114 = vld [vmem:[#allocation5 + $0x1a8] sm:$0xff]
    %v115 = vld [vmem:[#allocation5 + $0x1b0] sm:$0xff]
    %v116 = vld [vmem:[#allocation5 + $0x1b8] sm:$0xff]
    %v117 = vld [vmem:[#allocation5 + $0x1c0] sm:$0xff]
    %v118 = vld [vmem:[#allocation5 + $0x1c8] sm:$0xff]
    %v119 = vld [vmem:[#allocation5 + $0x1d0] sm:$0xff]
    %v120 = vld [vmem:[#allocation5 + $0x1d8] sm:$0xff]
    %v121 = vld [vmem:[#allocation5 + $0x1e0] sm:$0xff]
    %v122 = vld [vmem:[#allocation5 + $0x1e8] sm:$0xff]
    %v123 = vld [vmem:[#allocation5 + $0x1f0] sm:$0xff]
    %v124 = vld [vmem:[#allocation5 + $0x1f8] sm:$0xff]
    %125 = vmatprep.subr.mxu0 %v62
    %126 = vmatpush1.msra.mxu0 %v61
    %127 = vmatprep.subr.mxu0 %v64
    %128 = vmatpush1.msra.mxu0 %v63
    %129 = vmatprep.subr.mxu0 %v66
    %130 = vmatpush1.msra.mxu0 %v65
    %131 = vmatprep.subr.mxu0 %v68
    %132 = vmatpush1.msra.mxu0 %v67
    %133 = vmatprep.subr.mxu0 %v70
    %134 = vmatpush1.msra.mxu0 %v69
    %135 = vmatprep.subr.mxu0 %v72
    %136 = vmatpush1.msra.mxu0 %v71
    %137 = vmatprep.subr.mxu0 %v74
    %138 = vmatpush1.msra.mxu0 %v73
    %139 = vmatprep.subr.mxu0 %v76
    %140 = vmatpush1.msra.mxu0 %v75
    %141 = vmatprep.subr.mxu0 %v78
    %142 = vmatpush1.msra.mxu0 %v77
    %143 = vmatprep.subr.mxu0 %v80
    %144 = vmatpush1.msra.mxu0 %v79
    %145 = vmatprep.subr.mxu0 %v82
    %146 = vmatpush1.msra.mxu0 %v81
    %147 = vmatprep.subr.mxu0 %v84
    %148 = vmatpush1.msra.mxu0 %v83
    %149 = vmatprep.subr.mxu0 %v86
    %150 = vmatpush1.msra.mxu0 %v85
    %151 = vmatprep.subr.mxu0 %v88
    %152 = vmatpush1.msra.mxu0 %v87
    %153 = vmatprep.subr.mxu0 %v90
    %154 = vmatpush1.msra.mxu0 %v89
    %155 = vmatprep.subr.mxu0 %v92
    %156 = vmatpush1.msra.mxu0 %v91
    %157 = vmatprep.subr.mxu0 %v94
    %158 = vmatpush1.msra.mxu0 %v93
    %159 = vmatprep.subr.mxu0 %v96
    %160 = vmatpush1.msra.mxu0 %v95
    %161 = vmatprep.subr.mxu0 %v98
    %162 = vmatpush1.msra.mxu0 %v97
    %163 = vmatprep.subr.mxu0 %v100
    %164 = vmatpush1.msra.mxu0 %v99
    %165 = vmatprep.subr.mxu0 %v102
    %166 = vmatpush1.msra.mxu0 %v101
    %167 = vmatprep.subr.mxu0 %v104
    %168 = vmatpush1.msra.mxu0 %v103
    %169 = vmatprep.subr.mxu0 %v106
    %170 = vmatpush1.msra.mxu0 %v105
    %171 = vmatprep.subr.mxu0 %v108
    %172 = vmatpush1.msra.mxu0 %v107
    %173 = vmatprep.subr.mxu0 %v110
    %174 = vmatpush1.msra.mxu0 %v109
    %175 = vmatprep.subr.mxu0 %v112
    %176 = vmatpush1.msra.mxu0 %v111
    %177 = vmatprep.subr.mxu0 %v114
    %178 = vmatpush1.msra.mxu0 %v113
    %179 = vmatprep.subr.mxu0 %v116
    %180 = vmatpush1.msra.mxu0 %v115
    %181 = vmatprep.subr.mxu0 %v118
    %182 = vmatpush1.msra.mxu0 %v117
    %183 = vmatprep.subr.mxu0 %v120
    %184 = vmatpush1.msra.mxu0 %v119
    %185 = vmatprep.subr.mxu0 %v122
    %186 = vmatpush1.msra.mxu0 %v121
    %187 = vmatprep.subr.mxu0 %v124
    %188 = vmatpush1.msra.mxu0 %v123
    %189 = vmatprep.mubr.f32.mxu0 %v52
    %190 = vmatmul.mubr.f32.gmra.mrb[0].mxu0 %v51
    %v191 = vpop.f32.mrb[0].mxu0
    %v192 = vadd.f32 0.0, %v191
    %v193 = vpop.f32.mrb[0].mxu0
    %v194 = vadd.f32 0.0, %v193
    %195 = vdwg.mxu0
    %v196 = vmul.f32 %v192, %v51
    %v197 = vmul.f32 %v194, %v52
    %v198 = vadd.f32 %v196, %v197
    %199 = vadd.xlane.f32.xlu0 %v198
    %v200 = vpop.xlane.xlu0 %199
    %v201 = vmul.f32 %v200, %v60
    %v202 = vld [vmem:[%s2] sm:$0x1]
    %v204 = vlaneseq
    %v205 = vshrl.u32 %v204, 7
    %v206 = vsub.s32 0, %v205
    %v207 = vrot.slane %v202, %v206
    %v209 = vmul.f32 %v201, %v207
    %v210 = vld [vmem:[%s3] sm:$0x1]
    %v212 = vlaneseq
    %v213 = vshrl.u32 %v212, 7
    %v214 = vsub.s32 0, %v213
    %v215 = vrot.slane %v210, %v214
    %v217 = vadd.f32 %v209, %v215
    %218 = vmax.xlane.f32.xlu0 %v217
    %v219 = vpop.xlane.xlu0 %218
    %v220 = vsub.f32 %v217, %v219
    %v221 = vmul.f32 %v220, 1.442695
    %v222 = vpow.pop %v221
    %223 = vadd.xlane.f32.xlu0 %v222
    %v224 = vpop.xlane.xlu0 %223
    %v225 = vlog2.pop %v224
    %v226 = vmul.f32 %v225, 0.6931472
    %v227 = vadd.f32 %v226, %v219
    %v228 = vsub.f32 %v217, %v227
    %vm229 = vcmask 80896
    %230 = vst.msk [vmem:[#allocation7] sm:$0xff] %vm229, %v228
    // Predicated region
    $region26: #{quantum_classifier_forward.1} parent=1 // pred_check
      _
    $region27: #{quantum_classifier_forward.1} parent=1 // pred_check_branch
      %232 = sbr.rel (0) target = $region29
    $region28: #{quantum_classifier_forward.1} parent=1 // pred_region
      %s234 = ssub.s32 128, 128
      %235 = vsyncadd [#allocation4], %s234
      %s237 = sshll.u32 [#allocation7], 4
      %s238 = int_to_ptr.vmem [resolvable:$true] %s237
      %240 = dma.vmem_to_hbm [thread:$0]  %s238, 128, %s4, [#allocation4]
    $region29: #{quantum_classifier_forward.1} parent=1 // pred_fallthru
      _
    // Predicated region
    $region30: #{quantum_classifier_forward.1} parent=1 // pred_check
      _
    $region31: #{quantum_classifier_forward.1} parent=1 // pred_check_branch
      %242 = sbr.rel (0) target = $region33
    $region32: #{quantum_classifier_forward.1} parent=1 // pred_region
      %243 = dma.done [#allocation4], 128
    $region33: #{quantum_classifier_forward.1} parent=1 // pred_fallthru
      _
    %244 = vsyncpa [#allocation3], 1
    %245 = vsyncpa [#allocation6], 1
    %246 = vsyncpa [#allocation4], 1

</llo_original>
